<compile_context>
chip_gen: v5e
topology: v5e:2x2
jax: 0.10.0
libtpu: 0.0.40
codegen_flags: <defaults>
</compile_context>

<pallas_src>
import functools

import jax
import jax.numpy as jnp
from jax.experimental import pallas as pl
from jax.experimental.pallas import tpu as pltpu

_LANES = 128
_SUBLANES = 8


def _dice_sums_kernel(x_ref, t_ref, out_ref, acc_i, acc_z, acc_y, *,
                      hw, s_blk, n_classes, apply_softmax, needs_mask):
    """Accumulate per-class [intersect, z_sum, y_sum] for one batch element.

    x_ref  : (1, C, S, 128)  scores (native dtype) for one pixel-row block
    t_ref  : (1, 1, S, 128)  int32 class labels for the same block
    out_ref: (1, C, 3)       per-batch sums, written once in the epilogue
    acc_*  : (C, 8, 128)     f32 vreg-shaped running partial sums
    """
    j = pl.program_id(1)

    @pl.when(j == 0)
    def _():
        acc_i[...] = jnp.zeros_like(acc_i)
        acc_z[...] = jnp.zeros_like(acc_z)
        acc_y[...] = jnp.zeros_like(acc_y)

    x = x_ref[0].astype(jnp.float32)          # (C, S, 128)
    t = t_ref[0, 0]                           # (S, 128) int32

    if apply_softmax:
        # Softmax over the class axis = C-way elementwise ops over dense
        # (S, 128) slabs (no cross-sublane XLU reduce); one reciprocal per
        # pixel instead of C divides.
        m = jnp.max(x, axis=0, keepdims=True)               # (1, S, 128)
        e = jnp.exp(x - m)
        denom = jnp.sum(e, axis=0, keepdims=True)
        x = e * pl.reciprocal(denom, approx=True)

    if needs_mask:
        # Pixels past the true H*W (wrapper pad and/or Pallas block-tail
        # padding): one select on the labels and one on x; onehot is then
        # automatically zero there.  Selects (not multiplies) so garbage
        # NaN/Inf never leaks into the sums.
        row = jax.lax.broadcasted_iota(jnp.int32, (s_blk, _LANES), 0)
        lane = jax.lax.broadcasted_iota(jnp.int32, (s_blk, _LANES), 1)
        pix = (j * s_blk + row) * _LANES + lane
        valid = pix < hw
        t = jnp.where(valid, t, -1)
        x = jnp.where(valid[None, :, :], x, 0.0)

    cls = jax.lax.broadcasted_iota(jnp.int32, (n_classes, s_blk, _LANES), 0)
    onehot = (t[None, :, :] == cls).astype(jnp.float32)      # (C, S, 128)

    # Partial-sum into vreg-shaped accumulators: reducing axis 1 of
    # (C, S//8, 8, 128) is pure elementwise vector adds (no XLU in hot loop).
    xr = x.reshape(n_classes, s_blk // _SUBLANES, _SUBLANES, _LANES)
    hr = onehot.reshape(n_classes, s_blk // _SUBLANES, _SUBLANES, _LANES)
    acc_i[...] += jnp.sum(xr * hr, axis=1)
    acc_z[...] += jnp.sum(xr * xr, axis=1)
    acc_y[...] += jnp.sum(hr, axis=1)

    @pl.when(j == pl.num_programs(1) - 1)
    def _():
        def _reduce(a):                              # (C, 8, 128) -> (C, 1)
            return jnp.sum(jnp.sum(a, axis=2), axis=1, keepdims=True)
        out_ref[0] = jnp.concatenate(
            [_reduce(acc_i[...]), _reduce(acc_z[...]), _reduce(acc_y[...])],
            axis=1)


def _vmem_limit_bytes():
    """Generation-aware scoped-VMEM limit: ~half of physical VMEM
    (64 MiB on 128 MiB v5e/v6e parts, 32 MiB on 64 MiB v7x parts)."""
    try:
        cap = int(pltpu.get_tpu_info().vmem_capacity_bytes)
    except Exception:
        cap = 64 * 1024 * 1024            # conservative (v7x-like) fallback
    return min(96 * 1024 * 1024, cap // 2)


def _choose_rows(n_rows, n_classes, itemsize, budget_bytes):
    """Pick the per-block sublane-row count S (multiple of 8): large enough
    that each grid step moves ~budget_bytes of HBM traffic (amortizing the
    ~0.35us fixed per-step cost), preferring an S that divides n_rows so the
    block-tail mask compiles away."""
    bytes_per_row = _LANES * (n_classes * itemsize + 4)   # scores + int32 labels
    s = max(_SUBLANES,
            (budget_bytes // bytes_per_row) // _SUBLANES * _SUBLANES)
    s = min(s, n_rows)
    if n_rows % s != 0:
        for cand in range(s, max(_SUBLANES, s // 2) - 1, -_SUBLANES):
            if n_rows % cand == 0:
                return cand
    return s


def _dice_sums(scores, labels, hw, n_classes, softmax, block_rows):
    # scores: (B, C, NP, 128) native dtype; labels: (B, 1, NP, 128) int32
    b, c, n_rows, _ = scores.shape
    vmem_limit = _vmem_limit_bytes()
    if block_rows is None:
        budget = min(8 * 1024 * 1024, vmem_limit // 6)
        s_blk = _choose_rows(n_rows, c, scores.dtype.itemsize, budget)
    else:                                   # test/override hook
        s_blk = max(_SUBLANES, (int(block_rows) // _SUBLANES) * _SUBLANES)
        s_blk = min(s_blk, n_rows)
    needs_mask = (hw != n_rows * _LANES) or (n_rows % s_blk != 0)
    grid = (b, pl.cdiv(n_rows, s_blk))

    kernel = functools.partial(
        _dice_sums_kernel, hw=hw, s_blk=s_blk, n_classes=c,
        apply_softmax=bool(softmax), needs_mask=needs_mask)

    elems = b * c * n_rows * _LANES
    cost = pl.CostEstimate(
        flops=(14 if softmax else 8) * elems,
        transcendentals=(elems + b * n_rows * _LANES) if softmax else 0,
        bytes_accessed=(scores.size * scores.dtype.itemsize
                        + labels.size * 4 + b * c * 3 * 4))

    return pl.pallas_call(
        kernel,
        out_shape=jax.ShapeDtypeStruct((b, c, 3), jnp.float32),
        grid_spec=pltpu.PrefetchScalarGridSpec(
            num_scalar_prefetch=0,
            grid=grid,
            in_specs=[
                pl.BlockSpec((1, c, s_blk, _LANES),
                             lambda bi, j: (bi, 0, j, 0)),
                pl.BlockSpec((1, 1, s_blk, _LANES),
                             lambda bi, j: (bi, 0, j, 0)),
            ],
            out_specs=pl.BlockSpec((1, c, 3), lambda bi, j: (bi, 0, 0)),
            scratch_shapes=[pltpu.VMEM((c, _SUBLANES, _LANES), jnp.float32)] * 3,
        ),
        compiler_params=pltpu.CompilerParams(
            dimension_semantics=("parallel", "arbitrary"),
            vmem_limit_bytes=vmem_limit,
        ),
        cost_estimate=cost,
    )(scores, labels)


@functools.partial(jax.jit,
                   static_argnames=("n_classes", "softmax", "block_rows"))
def dice_loss(inputs, target, n_classes, weight=None, softmax=False,
              block_rows=None):
    """Matches DiceLoss.forward(inputs, target, weight, softmax).

    inputs: (B, C, H, W) scores/logits (any float dtype; upcast in-kernel)
    target: (B, H, W) integer class labels
    """
    b, c, h, w = inputs.shape
    assert c == n_classes
    hw = h * w

    # Contiguous reshape (free); int32 labels (no-op for the usual int32
    # targets — narrower integer labels could be kept end-to-end to shave
    # label HBM traffic when the producer provides them).
    scores = inputs.reshape(b, c, hw)
    labels = target.reshape(b, 1, hw).astype(jnp.int32)

    # Pad the pixel axis to a multiple of 8*128 so it lays out as dense
    # (sublane, lane) slabs.  Free for typical aligned shapes; padded pixels
    # are masked out inside the kernel.
    row_elems = _SUBLANES * _LANES
    padded_hw = ((hw + row_elems - 1) // row_elems) * row_elems
    if padded_hw != hw:
        pad = padded_hw - hw
        scores = jnp.pad(scores, ((0, 0), (0, 0), (0, pad)))
        labels = jnp.pad(labels, ((0, 0), (0, 0), (0, pad)),
                         constant_values=-1)
    n_rows = padded_hw // _LANES
    scores = scores.reshape(b, c, n_rows, _LANES)
    labels = labels.reshape(b, 1, n_rows, _LANES)

    sums = _dice_sums(scores, labels, hw, n_classes, softmax, block_rows)
    sums = jnp.sum(sums, axis=0)                        # (C, 3) over batch

    smooth = 1e-05
    intersect, z_sum, y_sum = sums[:, 0], sums[:, 1], sums[:, 2]
    dice = 1.0 - (2.0 * intersect + smooth) / (z_sum + y_sum + smooth)  # (C,)

    if weight is None:
        weight = jnp.ones((n_classes,), jnp.float32)
    else:
        weight = jnp.asarray(weight, jnp.float32)
    return jnp.sum(dice * weight) / n_classes


def _reference(inputs, target, n_classes, weight=None, softmax=False):
    # Pure-JAX re-implementation of the PyTorch forward, for verification.
    if softmax:
        inputs = jax.nn.softmax(inputs, axis=1)
    onehot = (target[:, None, :, :] ==
              jnp.arange(n_classes)[None, :, None, None]).astype(jnp.float32)
    if weight is None:
        weight = [1.0] * n_classes
    smooth = 1e-05
    loss = 0.0
    for i in range(n_classes):
        score = inputs[:, i].astype(jnp.float32)
        tgt = onehot[:, i]
        intersect = jnp.sum(score * tgt)
        y_sum = jnp.sum(tgt * tgt)
        z_sum = jnp.sum(score * score)
        dice = 1.0 - (2.0 * intersect + smooth) / (z_sum + y_sum + smooth)
        loss = loss + dice * weight[i]
    return loss / n_classes


if __name__ == "__main__":
    key = jax.random.PRNGKey(0)
    k1, k2, k3, k4, k5, k6 = jax.random.split(key, 6)

    # Case 1: fused softmax path (approx reciprocal), aligned-ish small image.
    B, C, H, W = 2, 4, 16, 16
    logits = jax.random.normal(k1, (B, C, H, W), dtype=jnp.float32)
    target = jax.random.randint(k2, (B, H, W), 0, C, dtype=jnp.int32)
    loss = jax.block_until_ready(dice_loss(logits, target, n_classes=C,
                                           softmax=True))
    ref = _reference(logits, target, n_classes=C, softmax=True)
    # Looser tolerance: kernel uses EUP approximate reciprocal in the softmax.
    assert jnp.allclose(loss, ref, rtol=5e-3, atol=1e-4), (loss, ref)

    # Case 2: non-aligned pixel count (exercises wrapper pad + in-kernel
    # mask), explicit class weights, no softmax.
    B2, C2, H2, W2 = 2, 4, 18, 18
    probs = jax.nn.softmax(
        jax.random.normal(k3, (B2, C2, H2, W2), dtype=jnp.float32), axis=1)
    target2 = jax.random.randint(k4, (B2, H2, W2), 0, C2, dtype=jnp.int32)
    wgt = jnp.array([0.5, 1.0, 1.5, 2.0], dtype=jnp.float32)
    loss2 = jax.block_until_ready(dice_loss(probs, target2, n_classes=C2,
                                            weight=wgt, softmax=False))
    ref2 = _reference(probs, target2, n_classes=C2, weight=wgt, softmax=False)
    assert jnp.allclose(loss2, ref2, rtol=1e-5, atol=1e-5), (loss2, ref2)

    # Case 3: force small blocks (block_rows=8) so the multi-step accumulator
    # path (init / accumulate / epilogue across the pixel grid axis) runs.
    B3, C3, H3, W3 = 2, 3, 48, 48
    probs3 = jax.nn.softmax(
        jax.random.normal(k5, (B3, C3, H3, W3), dtype=jnp.float32), axis=1)
    target3 = jax.random.randint(k6, (B3, H3, W3), 0, C3, dtype=jnp.int32)
    loss3 = jax.block_until_ready(dice_loss(probs3, target3, n_classes=C3,
                                            softmax=False, block_rows=8))
    ref3 = _reference(probs3, target3, n_classes=C3, softmax=False)
    assert jnp.allclose(loss3, ref3, rtol=1e-5, atol=1e-5), (loss3, ref3)

    print("KERNEL_OK")
</pallas_src>

<mosaic_0001>
module attributes {stable_mosaic.version = 11 : i64} {
  func.func @_dice_sums_kernel(%arg0: i32, %arg1: i32, %arg2: memref<1x4x8x128xf32, #tpu.memory_space<vmem>>, %arg3: memref<1x1x8x128xi32, #tpu.memory_space<vmem>>, %arg4: memref<1x4x3xf32, #tpu.memory_space<vmem>>, %arg5: memref<4x8x128xf32, #tpu.memory_space<vmem>>, %arg6: memref<4x8x128xf32, #tpu.memory_space<vmem>>, %arg7: memref<4x8x128xf32, #tpu.memory_space<vmem>>) attributes {dimension_semantics = [#tpu.dimension_semantics<parallel>, #tpu.dimension_semantics<arbitrary>], iteration_bounds = array<i64: 2, 1>, scalar_prefetch = 0 : i64, scratch_operands = 3 : i64, tpu.core_type = #tpu.core_type<tc>, window_params = [{transform_indices = @transform_0, window_bounds = array<i64: 1, 4, 8, 128>}, {transform_indices = @transform_1, window_bounds = array<i64: 1, 1, 8, 128>}, {transform_indices = @transform_2, window_bounds = array<i64: 1, 4, 3>}]} {
    %c0_i32 = arith.constant 0 : i32
    %0 = arith.cmpi eq, %arg1, %c0_i32 : i32
    %1 = arith.extui %0 : i1 to i32
    %c0_i32_0 = arith.constant 0 : i32
    %2 = arith.cmpi ne, %1, %c0_i32_0 : i32
    scf.if %2 {
      %cst_33 = arith.constant 0.000000e+00 : f32
      %59 = vector.broadcast %cst_33 : f32 to vector<4x8x128xf32>
      %c0_34 = arith.constant 0 : index
      %c0_35 = arith.constant 0 : index
      %c0_36 = arith.constant 0 : index
      %60 = vector.load %arg5[%c0_34, %c0_35, %c0_36] : memref<4x8x128xf32, #tpu.memory_space<vmem>>, vector<4x8x128xf32>
      tpu.vector_store %arg5[%c0_34, %c0_35, %c0_36], %59 {strides = array<i32>} : memref<4x8x128xf32, #tpu.memory_space<vmem>>, vector<4x8x128xf32>,
      %cst_37 = arith.constant 0.000000e+00 : f32
      %61 = vector.broadcast %cst_37 : f32 to vector<4x8x128xf32>
      %c0_38 = arith.constant 0 : index
      %c0_39 = arith.constant 0 : index
      %c0_40 = arith.constant 0 : index
      %62 = vector.load %arg6[%c0_38, %c0_39, %c0_40] : memref<4x8x128xf32, #tpu.memory_space<vmem>>, vector<4x8x128xf32>
      tpu.vector_store %arg6[%c0_38, %c0_39, %c0_40], %61 {strides = array<i32>} : memref<4x8x128xf32, #tpu.memory_space<vmem>>, vector<4x8x128xf32>,
      %cst_41 = arith.constant 0.000000e+00 : f32
      %63 = vector.broadcast %cst_41 : f32 to vector<4x8x128xf32>
      %c0_42 = arith.constant 0 : index
      %c0_43 = arith.constant 0 : index
      %c0_44 = arith.constant 0 : index
      %64 = vector.load %arg7[%c0_42, %c0_43, %c0_44] : memref<4x8x128xf32, #tpu.memory_space<vmem>>, vector<4x8x128xf32>
      tpu.vector_store %arg7[%c0_42, %c0_43, %c0_44], %63 {strides = array<i32>} : memref<4x8x128xf32, #tpu.memory_space<vmem>>, vector<4x8x128xf32>,
    } else {
    }
    %c0 = arith.constant 0 : index
    %c0_1 = arith.constant 0 : index
    %c0_2 = arith.constant 0 : index
    %c0_3 = arith.constant 0 : index
    %3 = vector.load %arg2[%c0, %c0_1, %c0_2, %c0_3] : memref<1x4x8x128xf32, #tpu.memory_space<vmem>>, vector<1x4x8x128xf32>
    %4 = vector.shape_cast %3 : vector<1x4x8x128xf32> to vector<4x8x128xf32>
    %c0_4 = arith.constant 0 : index
    %c0_5 = arith.constant 0 : index
    %c0_6 = arith.constant 0 : index
    %c0_7 = arith.constant 0 : index
    %5 = vector.load %arg3[%c0_4, %c0_5, %c0_6, %c0_7] : memref<1x1x8x128xi32, #tpu.memory_space<vmem>>, vector<1x1x8x128xi32>
    %6 = vector.shape_cast %5 : vector<1x1x8x128xi32> to vector<8x128xi32>
    %cst = arith.constant dense<0xFF800000> : vector<8x128xf32>
    %7 = vector.multi_reduction <maximumf>, %4, %cst [0] : vector<4x8x128xf32> to vector<8x128xf32>
    %8 = vector.shape_cast %7 : vector<8x128xf32> to vector<1x8x128xf32>
    %9 = vector.broadcast %8 : vector<1x8x128xf32> to vector<4x8x128xf32>
    %10 = arith.subf %4, %9 : vector<4x8x128xf32>
    %11 = math.exp %10 : vector<4x8x128xf32>
    %cst_8 = arith.constant dense<0.000000e+00> : vector<8x128xf32>
    %12 = vector.multi_reduction <add>, %11, %cst_8 [0] : vector<4x8x128xf32> to vector<8x128xf32>
    %13 = vector.shape_cast %12 : vector<8x128xf32> to vector<1x8x128xf32>
    %14 = tpu.reciprocal %13 {approx = true} : vector<1x8x128xf32> -> vector<1x8x128xf32>
    %15 = vector.broadcast %14 : vector<1x8x128xf32> to vector<4x8x128xf32>
    %16 = arith.mulf %11, %15 : vector<4x8x128xf32>
    %17 = tpu.iota {dimensions = array<i32: 0>} : vector<8x128xi32>
    %18 = tpu.iota {dimensions = array<i32: 1>} : vector<8x128xi32>
    %c8_i32 = arith.constant 8 : i32
    %19 = arith.muli %arg1, %c8_i32 : i32
    %20 = vector.broadcast %19 : i32 to vector<8x128xi32>
    %21 = arith.addi %20, %17 : vector<8x128xi32>
    %c128_i32 = arith.constant 128 : i32
    %22 = vector.broadcast %c128_i32 : i32 to vector<8x128xi32>
    %23 = arith.muli %21, %22 : vector<8x128xi32>
    %24 = arith.addi %23, %18 : vector<8x128xi32>
    %c256_i32 = arith.constant 256 : i32
    %25 = vector.broadcast %c256_i32 : i32 to vector<8x128xi32>
    %26 = arith.cmpi slt, %24, %25 : vector<8x128xi32>
    %c-1_i32 = arith.constant -1 : i32
    %27 = vector.broadcast %c-1_i32 : i32 to vector<8x128xi32>
    %28 = arith.select %26, %6, %27 : vector<8x128xi1>, vector<8x128xi32>
    %29 = vector.shape_cast %26 : vector<8x128xi1> to vector<1x8x128xi1>
    %cst_9 = arith.constant 0.000000e+00 : f32
    %30 = vector.shape_cast %29 : vector<1x8x128xi1> to vector<1x8x128xi1>
    %31 = vector.broadcast %30 : vector<1x8x128xi1> to vector<4x8x128xi1>
    %32 = vector.broadcast %cst_9 : f32 to vector<4x8x128xf32>
    %33 = arith.select %31, %16, %32 : vector<4x8x128xi1>, vector<4x8x128xf32>
    %34 = tpu.iota {dimensions = array<i32: 0>} : vector<4x8x128xi32>
    %35 = vector.shape_cast %28 : vector<8x128xi32> to vector<1x8x128xi32>
    %36 = vector.broadcast %35 : vector<1x8x128xi32> to vector<4x8x128xi32>
    %37 = arith.cmpi eq, %36, %34 : vector<4x8x128xi32>
    %38 = arith.extui %37 : vector<4x8x128xi1> to vector<4x8x128xi32>
    %39 = arith.sitofp %38 : vector<4x8x128xi32> to vector<4x8x128xf32>
    %40 = vector.shape_cast %33 : vector<4x8x128xf32> to vector<4x1x8x128xf32>
    %41 = vector.shape_cast %39 : vector<4x8x128xf32> to vector<4x1x8x128xf32>
    %c0_10 = arith.constant 0 : index
    %c0_11 = arith.constant 0 : index
    %c0_12 = arith.constant 0 : index
    %42 = vector.load %arg5[%c0_10, %c0_11, %c0_12] : memref<4x8x128xf32, #tpu.memory_space<vmem>>, vector<4x8x128xf32>
    %43 = arith.mulf %40, %41 : vector<4x1x8x128xf32>
    %cst_13 = arith.constant dense<0.000000e+00> : vector<4x8x128xf32>
    %44 = vector.multi_reduction <add>, %43, %cst_13 [1] : vector<4x1x8x128xf32> to vector<4x8x128xf32>
    %45 = arith.addf %42, %44 : vector<4x8x128xf32>
    %c0_14 = arith.constant 0 : index
    %c0_15 = arith.constant 0 : index
    %c0_16 = arith.constant 0 : index
    %46 = vector.load %arg5[%c0_14, %c0_15, %c0_16] : memref<4x8x128xf32, #tpu.memory_space<vmem>>, vector<4x8x128xf32>
    tpu.vector_store %arg5[%c0_14, %c0_15, %c0_16], %45 {strides = array<i32>} : memref<4x8x128xf32, #tpu.memory_space<vmem>>, vector<4x8x128xf32>,
    %c0_17 = arith.constant 0 : index
    %c0_18 = arith.constant 0 : index
    %c0_19 = arith.constant 0 : index
    %47 = vector.load %arg6[%c0_17, %c0_18, %c0_19] : memref<4x8x128xf32, #tpu.memory_space<vmem>>, vector<4x8x128xf32>
    %48 = arith.mulf %40, %40 : vector<4x1x8x128xf32>
    %cst_20 = arith.constant dense<0.000000e+00> : vector<4x8x128xf32>
    %49 = vector.multi_reduction <add>, %48, %cst_20 [1] : vector<4x1x8x128xf32> to vector<4x8x128xf32>
    %50 = arith.addf %47, %49 : vector<4x8x128xf32>
    %c0_21 = arith.constant 0 : index
    %c0_22 = arith.constant 0 : index
    %c0_23 = arith.constant 0 : index
    %51 = vector.load %arg6[%c0_21, %c0_22, %c0_23] : memref<4x8x128xf32, #tpu.memory_space<vmem>>, vector<4x8x128xf32>
    tpu.vector_store %arg6[%c0_21, %c0_22, %c0_23], %50 {strides = array<i32>} : memref<4x8x128xf32, #tpu.memory_space<vmem>>, vector<4x8x128xf32>,
    %c0_24 = arith.constant 0 : index
    %c0_25 = arith.constant 0 : index
    %c0_26 = arith.constant 0 : index
    %52 = vector.load %arg7[%c0_24, %c0_25, %c0_26] : memref<4x8x128xf32, #tpu.memory_space<vmem>>, vector<4x8x128xf32>
    %cst_27 = arith.constant dense<0.000000e+00> : vector<4x8x128xf32>
    %53 = vector.multi_reduction <add>, %41, %cst_27 [1] : vector<4x1x8x128xf32> to vector<4x8x128xf32>
    %54 = arith.addf %52, %53 : vector<4x8x128xf32>
    %c0_28 = arith.constant 0 : index
    %c0_29 = arith.constant 0 : index
    %c0_30 = arith.constant 0 : index
    %55 = vector.load %arg7[%c0_28, %c0_29, %c0_30] : memref<4x8x128xf32, #tpu.memory_space<vmem>>, vector<4x8x128xf32>
    tpu.vector_store %arg7[%c0_28, %c0_29, %c0_30], %54 {strides = array<i32>} : memref<4x8x128xf32, #tpu.memory_space<vmem>>, vector<4x8x128xf32>,
    %c0_i32_31 = arith.constant 0 : i32
    %56 = arith.cmpi eq, %arg1, %c0_i32_31 : i32
    %57 = arith.extui %56 : i1 to i32
    %c0_i32_32 = arith.constant 0 : i32
    %58 = arith.cmpi ne, %57, %c0_i32_32 : i32
    scf.if %58 {
      %c0_33 = arith.constant 0 : index
      %c0_34 = arith.constant 0 : index
      %c0_35 = arith.constant 0 : index
      %59 = vector.load %arg5[%c0_33, %c0_34, %c0_35] : memref<4x8x128xf32, #tpu.memory_space<vmem>>, vector<4x8x128xf32>
      %cst_36 = arith.constant dense<0.000000e+00> : vector<4x8xf32>
      %60 = vector.multi_reduction <add>, %59, %cst_36 [2] : vector<4x8x128xf32> to vector<4x8xf32>
      %cst_37 = arith.constant dense<0.000000e+00> : vector<4xf32>
      %61 = vector.multi_reduction <add>, %60, %cst_37 [1] : vector<4x8xf32> to vector<4xf32>
      %62 = vector.shape_cast %61 : vector<4xf32> to vector<4x1xf32>
      %c0_38 = arith.constant 0 : index
      %c0_39 = arith.constant 0 : index
      %c0_40 = arith.constant 0 : index
      %63 = vector.load %arg6[%c0_38, %c0_39, %c0_40] : memref<4x8x128xf32, #tpu.memory_space<vmem>>, vector<4x8x128xf32>
      %cst_41 = arith.constant dense<0.000000e+00> : vector<4x8xf32>
      %64 = vector.multi_reduction <add>, %63, %cst_41 [2] : vector<4x8x128xf32> to vector<4x8xf32>
      %cst_42 = arith.constant dense<0.000000e+00> : vector<4xf32>
      %65 = vector.multi_reduction <add>, %64, %cst_42 [1] : vector<4x8xf32> to vector<4xf32>
      %66 = vector.shape_cast %65 : vector<4xf32> to vector<4x1xf32>
      %c0_43 = arith.constant 0 : index
      %c0_44 = arith.constant 0 : index
      %c0_45 = arith.constant 0 : index
      %67 = vector.load %arg7[%c0_43, %c0_44, %c0_45] : memref<4x8x128xf32, #tpu.memory_space<vmem>>, vector<4x8x128xf32>
      %cst_46 = arith.constant dense<0.000000e+00> : vector<4x8xf32>
      %68 = vector.multi_reduction <add>, %67, %cst_46 [2] : vector<4x8x128xf32> to vector<4x8xf32>
      %cst_47 = arith.constant dense<0.000000e+00> : vector<4xf32>
      %69 = vector.multi_reduction <add>, %68, %cst_47 [1] : vector<4x8xf32> to vector<4xf32>
      %70 = vector.shape_cast %69 : vector<4xf32> to vector<4x1xf32>
      %71 = tpu.concatenate %62, %66, %70 in 1 : vector<4x1xf32>, vector<4x1xf32>, vector<4x1xf32> -> vector<4x3xf32>
      %c0_48 = arith.constant 0 : index
      %c0_49 = arith.constant 0 : index
      %c0_50 = arith.constant 0 : index
      %72 = vector.load %arg4[%c0_48, %c0_49, %c0_50] : memref<1x4x3xf32, #tpu.memory_space<vmem>>, vector<1x4x3xf32>
      %73 = vector.shape_cast %72 : vector<1x4x3xf32> to vector<4x3xf32>
      %74 = vector.shape_cast %71 : vector<4x3xf32> to vector<1x4x3xf32>
      tpu.vector_store %arg4[%c0_48, %c0_49, %c0_50], %74 {strides = array<i32>} : memref<1x4x3xf32, #tpu.memory_space<vmem>>, vector<1x4x3xf32>,
    } else {
    }
    return
  }
  func.func @transform_0(%arg0: i32, %arg1: i32) -> (i32, i32, i32, i32) {
    %c0_i32 = arith.constant 0 : i32
    %c0_i32_0 = arith.constant 0 : i32
    %c0_i32_1 = arith.constant 0 : i32
    return %arg0, %c0_i32, %arg1, %c0_i32_0 : i32, i32, i32, i32
  }
  func.func @transform_1(%arg0: i32, %arg1: i32) -> (i32, i32, i32, i32) {
    %c0_i32 = arith.constant 0 : i32
    %c0_i32_0 = arith.constant 0 : i32
    %c0_i32_1 = arith.constant 0 : i32
    return %arg0, %c0_i32, %arg1, %c0_i32_0 : i32, i32, i32, i32
  }
  func.func @transform_2(%arg0: i32, %arg1: i32) -> (i32, i32, i32) {
    %c0_i32 = arith.constant 0 : i32
    %c0_i32_0 = arith.constant 0 : i32
    %c0_i32_1 = arith.constant 0 : i32
    return %arg0, %c0_i32, %c0_i32_0 : i32, i32, i32
  }
}

</mosaic_0001>

<llo_original>
// kernel: dice_loss.1
$region0: #{dice_loss.1}
  #allocation0 [shape = 'u32[]', space=smem, size = 0x4, offset = 0x4, fixed_abs, tag = 'smem constant byte address 0x4 - core index']
  #allocation1 [shape = 'u32[72,128]{1,0:T(1,128)}', space=vmem, size = 0x9000, scoped, tag = 'internal scratch']
  #allocation2 [shape = 'f32[4,8,128]{2,1,0:T(8,128)}', space=vmem, size = 0x4000, scoped, tag = 'scratch operand']
  #allocation3 [shape = 'f32[4,8,128]{2,1,0:T(8,128)}', space=vmem, size = 0x4000, scoped, tag = 'scratch operand']
  #allocation4 [shape = 'f32[4,8,128]{2,1,0:T(8,128)}', space=vmem, size = 0x4000, scoped, tag = 'scratch operand']
  %s0 = inlined_call_operand.vmem [shape: f32[2,4,8,128], index: 0, kind: input, shape index: {}]
  %s1 = inlined_call_operand.vmem [shape: s32[2,1,8,128], index: 1, kind: input, shape index: {}]
  %s2 = inlined_call_operand.vmem [shape: f32[2,4,3], index: 2, kind: output, shape index: {}]
  %s3 = sld [smem:[#allocation0]]
  $region49: #{dice_loss.1} parent=0
    _
  %s5 = ssub.s32 1, %s3
  %s6 = scalar_select 0, %s5, %s3
  loop: start=0, step=1, limit=4
  $region2: #{dice_loss.1} parent=0 // loop_pre_header
    _
  $region3: #{dice_loss.1} parent=0 // loop_header
    %s8 = sphi 0, %s12
    %p9 = scmp.ge.s32.totalorder %s8, 4
    %s15 = sphi 0, %s27
    %s16 = sphi 0, %s23
    %s17 = sphi 0, %s15
    %s18 = sphi 0, %s16
    %s19 = sphi 0, %s17
    %s20 = sphi 0, %s18
    %s32 = sphi 0, %s34
    %s35 = sphi 0, %s32
    %s36 = sphi 0, %s35
    %s52 = sphi 0, %s36
    %s60 = sphi 0, %s62
    %s63 = sphi 0, %s60
    %s64 = sphi 0, %s63
    %s80 = sphi 0, %s64
    %s86 = sphi 0, %s88
    %s89 = sphi 0, %s86
    %s90 = sphi 0, %s89
    %s106 = sphi 0, %s90
  $region4: #{dice_loss.1} parent=0 // loop_header_branch
    %11 = sbr.rel (%p9) target = $region8
  $region5: #{dice_loss.1} parent=0 // loop_body
    %s13 = ssub.s32 %s8, 1
    %s14 = ssub.s32 %s8, 2
    %s21 = sadd.s32 1, %s16
    %p22 = scmp.ge.s32.totalorder %s21, 1
    %s23 = scalar_select %p22, 0, %s21
    %s24 = sadd.s32 1, %s15
    %s25 = scalar_select %p22, %s24, %s15
    %p26 = scmp.ge.s32.totalorder %s25, 2
    %s27 = scalar_select %p26, 0, %s25
    %s28 = ssub.s32 %s15, %s27
    %s29 = ssub.s32 %s16, %s23
    %s30 = sor.u32 %s28, %s29
    %p31 = scmp.eq.s32.totalorder %s30, 0
    %s33 = sadd.s32 %s32, 1
    %s34 = scalar_select %p31, %s32, %s33
    %p37 = pneg %p31
    %p38 = scmp.eq.s32.totalorder %s8, 1
    %p39 = por %p37, %p38
    %p40 = scmp.ne.s32.totalorder %s32, %s35
    %p41 = scmp.eq.s32.totalorder %s8, 0
    %p42 = por %p40, %p41
    %p43 = scmp.ne.s32.totalorder %s32, %s35
    %p44 = scmp.eq.s32.totalorder %s13, 1
    %p45 = por %p43, %p44
    %p46 = scmp.ne.s32.totalorder %s35, %s36
    %p47 = scmp.eq.s32.totalorder %s13, 0
    %p48 = por %p46, %p47
    %p49 = scmp.ne.s32.totalorder %s35, %s36
    %p50 = scmp.eq.s32.totalorder %s14, 1
    %p51 = por %p49, %p50
    %p53 = scmp.ne.s32.totalorder %s36, %s52
    %p54 = scmp.eq.s32.totalorder %s14, 0
    %p55 = por %p53, %p54
    %s56 = ssub.s32 %s15, %s27
    %s57 = ssub.s32 %s16, %s23
    %s58 = sor.u32 %s56, %s57
    %p59 = scmp.eq.s32.totalorder %s58, 0
    %s61 = sadd.s32 %s60, 1
    %s62 = scalar_select %p59, %s60, %s61
    %p65 = pneg %p59
    %p66 = scmp.eq.s32.totalorder %s8, 1
    %p67 = por %p65, %p66
    %p68 = scmp.ne.s32.totalorder %s60, %s63
    %p69 = scmp.eq.s32.totalorder %s8, 0
    %p70 = por %p68, %p69
    %p71 = scmp.ne.s32.totalorder %s60, %s63
    %p72 = scmp.eq.s32.totalorder %s13, 1
    %p73 = por %p71, %p72
    %p74 = scmp.ne.s32.totalorder %s63, %s64
    %p75 = scmp.eq.s32.totalorder %s13, 0
    %p76 = por %p74, %p75
    %p77 = scmp.ne.s32.totalorder %s63, %s64
    %p78 = scmp.eq.s32.totalorder %s14, 1
    %p79 = por %p77, %p78
    %p81 = scmp.ne.s32.totalorder %s64, %s80
    %p82 = scmp.eq.s32.totalorder %s14, 0
    %p83 = por %p81, %p82
    %s84 = ssub.s32 %s15, %s27
    %p85 = scmp.eq.s32.totalorder %s84, 0
    %s87 = sadd.s32 %s86, 1
    %s88 = scalar_select %p85, %s86, %s87
    %p91 = pneg %p85
    %p92 = scmp.eq.s32.totalorder %s8, 1
    %p93 = por %p91, %p92
    %p94 = scmp.ne.s32.totalorder %s86, %s89
    %p95 = scmp.eq.s32.totalorder %s8, 0
    %p96 = por %p94, %p95
    %p97 = scmp.ne.s32.totalorder %s86, %s89
    %p98 = scmp.eq.s32.totalorder %s13, 1
    %p99 = por %p97, %p98
    %p100 = scmp.ne.s32.totalorder %s89, %s90
    %p101 = scmp.eq.s32.totalorder %s13, 0
    %p102 = por %p100, %p101
    %p103 = scmp.ne.s32.totalorder %s89, %s90
    %p104 = scmp.eq.s32.totalorder %s14, 1
    %p105 = por %p103, %p104
    %p107 = scmp.ne.s32.totalorder %s90, %s106
    %p108 = scmp.eq.s32.totalorder %s14, 0
    %p109 = por %p107, %p108
    %p110 = scmp.le.s32.totalorder 1, %s8
    %p111 = scmp.lt.s32.totalorder %s8, 3
    %p112 = pnand %p110, %p111
    %p113 = pneg %p112
    // Predicated region
    $region9: #{dice_loss.1} parent=5 // pred_check
      _
    $region10: #{dice_loss.1} parent=5 // pred_check_branch
      %115 = sbr.rel (%p112) target = $region12
    $region11: #{dice_loss.1} parent=5 // pred_region
      %s116 = ssub.s32 %s8, 1
    $region12: #{dice_loss.1} parent=5 // pred_fallthru
      _
    %p117 = scmp.lt.s32.totalorder %s8, 2
    // Predicated region
    $region13: #{dice_loss.1} parent=5 // pred_check
      %p118 = pneg %p117
    $region14: #{dice_loss.1} parent=5 // pred_check_branch
      %120 = sbr.rel (%p118) target = $region16
    $region15: #{dice_loss.1} parent=5 // pred_region
      // Predicated region
      $region17: #{dice_loss.1} parent=15 // pred_check
        %p121 = pneg %p42
      $region18: #{dice_loss.1} parent=15 // pred_check_branch
        %123 = sbr.rel (%p121) target = $region20
      $region19: #{dice_loss.1} parent=15 // pred_region
        %p124 = scmp.lt.s32.totalorder %s15, 1
        %s125 = scalar_select %p124, %s15, 1
        %p126 = scmp.lt.s32.totalorder %s16, 0
        %s127 = scalar_select %p126, %s16, 0
        %s128 = smul.addr %s125, 4
        %s129 = sadd.s32 %s127, %s128
        %s130 = smul.addr %s129, 8
        %s131 = scalar_lea.vmem %s0, %s130
      $region20: #{dice_loss.1} parent=15 // pred_fallthru
        _
      // Predicated region
      $region21: #{dice_loss.1} parent=15 // pred_check
        %p132 = pneg %p70
      $region22: #{dice_loss.1} parent=15 // pred_check_branch
        %134 = sbr.rel (%p132) target = $region24
      $region23: #{dice_loss.1} parent=15 // pred_region
        %p135 = scmp.lt.s32.totalorder %s15, 1
        %s136 = scalar_select %p135, %s15, 1
        %p137 = scmp.lt.s32.totalorder %s16, 0
        %s138 = scalar_select %p137, %s16, 0
        %s139 = sadd.s32 %s138, %s136
        %s140 = smul.addr %s139, 8
        %s141 = scalar_lea.vmem %s1, %s140
      $region24: #{dice_loss.1} parent=15 // pred_fallthru
        _
    $region16: #{dice_loss.1} parent=5 // pred_fallthru
      _
    %p142 = scmp.le.s32.totalorder 1, %s8
    %p143 = scmp.lt.s32.totalorder %s8, 3
    %p144 = pnand %p142, %p143
    %p145 = pneg %p144
    // Predicated region
    $region25: #{dice_loss.1} parent=5 // pred_check
      _
    $region26: #{dice_loss.1} parent=5 // pred_check_branch
      %147 = sbr.rel (%p144) target = $region28
    $region27: #{dice_loss.1} parent=5 // pred_region
      %s148 = ssub.s32 %s8, 1
      %p149 = scmp.lt.s32.totalorder %s17, 1
      %s150 = scalar_select %p149, %s17, 1
      %p151 = scmp.lt.s32.totalorder %s18, 0
      %s152 = scalar_select %p151, %s18, 0
      %s153 = smul.addr %s150, 4
      %s154 = sadd.s32 %s152, %s153
      %s155 = smul.addr %s154, 8
      %s156 = scalar_lea.vmem %s0, %s155
      %p157 = pneg %p48
      %p158 = pneg %p45
      %p159 = scmp.lt.s32.totalorder %s17, 1
      %s160 = scalar_select %p159, %s17, 1
      %p161 = scmp.lt.s32.totalorder %s18, 0
      %s162 = scalar_select %p161, %s18, 0
      %s163 = sadd.s32 %s162, %s160
      %s164 = smul.addr %s163, 8
      %s165 = scalar_lea.vmem %s1, %s164
      %p166 = pneg %p76
      %p167 = pneg %p73
      %p168 = pneg %p102
      %p169 = pneg %p99
      %p170 = scmp.lt.s32.totalorder %s17, 1
      %s171 = scalar_select %p170, %s17, 1
      %s172 = smul.addr %s171, 4
      %s173 = scalar_lea.vmem %s2, %s172
      %p174 = scmp.lt.s32.totalorder %s17, 1
      %s175 = scalar_select %p174, %s17, 1
      %p176 = scmp.lt.s32.totalorder %s18, 0
      %s177 = scalar_select %p176, %s18, 0
      %s178 = smul.addr %s175, 4
      %s179 = sadd.s32 %s177, %s178
      %s180 = smul.addr %s179, 8
      %s181 = scalar_lea.vmem %s0, %s180
      %p182 = scmp.lt.s32.totalorder %s17, 1
      %s183 = scalar_select %p182, %s17, 1
      %p184 = scmp.lt.s32.totalorder %s18, 0
      %s185 = scalar_select %p184, %s18, 0
      %s186 = sadd.s32 %s185, %s183
      %s187 = smul.addr %s186, 8
      %s188 = scalar_lea.vmem %s1, %s187
      %p189 = scmp.lt.s32.totalorder %s17, 1
      %s190 = scalar_select %p189, %s17, 1
      %s191 = smul.addr %s190, 4
      %s192 = scalar_lea.vmem %s2, %s191
      %p193 = scmp.eq.s32.totalorder %s18, 0
      // Predicated region
      $region29: #{dice_loss.1} parent=27 // pred_check
        %p194 = pneg %p193
      $region30: #{dice_loss.1} parent=27 // pred_check_branch
        %196 = sbr.rel (%p194) target = $region32
      $region31: #{dice_loss.1} parent=27 // pred_region
        %197 = vst [vmem:[#allocation2] sm:$0xff] 0.0
        %198 = vst [vmem:[#allocation2 + $0x8] sm:$0xff] 0.0
        %199 = vst [vmem:[#allocation2 + $0x10] sm:$0xff] 0.0
        %200 = vst [vmem:[#allocation2 + $0x18] sm:$0xff] 0.0
        %201 = vst [vmem:[#allocation3] sm:$0xff] 0.0
        %202 = vst [vmem:[#allocation3 + $0x8] sm:$0xff] 0.0
        %203 = vst [vmem:[#allocation3 + $0x10] sm:$0xff] 0.0
        %204 = vst [vmem:[#allocation3 + $0x18] sm:$0xff] 0.0
        %205 = vst [vmem:[#allocation4] sm:$0xff] 0.0
        %206 = vst [vmem:[#allocation4 + $0x8] sm:$0xff] 0.0
        %207 = vst [vmem:[#allocation4 + $0x10] sm:$0xff] 0.0
        %208 = vst [vmem:[#allocation4 + $0x18] sm:$0xff] 0.0
      $region32: #{dice_loss.1} parent=27 // pred_fallthru
        _
      %v209 = vld [vmem:[%s181] sm:$0xff]
      %v210 = vld [vmem:[%s181 + $0x8] sm:$0xff]
      %v211 = vld [vmem:[%s181 + $0x10] sm:$0xff]
      %v212 = vld [vmem:[%s181 + $0x18] sm:$0xff]
      %v213 = vld [vmem:[%s188] sm:$0xff]
      %v214 = vmax.f32 %v209, %v210
      %v215 = vmax.f32 %v211, %v212
      %v216 = vmax.f32 %v214, %v215
      %v217 = vsub.f32 %v209, %v216
      %v218 = vsub.f32 %v210, %v216
      %v219 = vsub.f32 %v211, %v216
      %v220 = vsub.f32 %v212, %v216
      %v221 = vmul.f32 %v217, 1.442695
      %v222 = vpow.pop %v221
      %v223 = vmul.f32 %v218, 1.442695
      %v224 = vpow.pop %v223
      %v225 = vmul.f32 %v219, 1.442695
      %v226 = vpow.pop %v225
      %v227 = vmul.f32 %v220, 1.442695
      %v228 = vpow.pop %v227
      %v229 = vadd.f32 %v222, %v224
      %v230 = vadd.f32 %v229, %v226
      %v231 = vadd.f32 %v230, %v228
      %v232 = vrcp.pop %v231
      %v233 = vmul.f32 %v222, %v232
      %v234 = vmul.f32 %v224, %v232
      %v235 = vmul.f32 %v226, %v232
      %v236 = vmul.f32 %v228, %v232
      %v237 = vlaneseq
      %v238 = vshrl.u32 %v237, 7
      %v239 = vlaneseq
      %v240 = vand.u32 %v239, 127
      %s241 = smul.u32 %s18, 8
      %v242 = vstv %s241
      %v243 = vadd.s32 %v242, %v238
      %v244 = vmul.u32 %v243, 128
      %v245 = vadd.s32 %v244, %v240
      %vm246 = vcmp.lt.s32.totalorder %v245, 256
      %v247 = vsel %vm246, %v213, 4294967295
      %v248 = vsel %vm246, 1, 0
      %vm249 = vcmp.eq.s32.totalorder %v248, 1
      %v250 = vsel %vm249, %v233, 0.0
      %v251 = vsel %vm249, %v234, 0.0
      %v252 = vsel %vm249, %v235, 0.0
      %v253 = vsel %vm249, %v236, 0.0
      %vm254 = vcmp.eq.s32.totalorder %v247, 0
      %vm255 = vcmp.eq.s32.totalorder %v247, 1
      %vm256 = vcmp.eq.s32.totalorder %v247, 2
      %vm257 = vcmp.eq.s32.totalorder %v247, 3
      %v258 = vsel %vm254, 1, 0
      %v259 = vsel %vm255, 1, 0
      %v260 = vsel %vm256, 1, 0
      %v261 = vsel %vm257, 1, 0
      %v262 = vcvt.s32.f32 %v258
      %v263 = vcvt.s32.f32 %v259
      %v264 = vcvt.s32.f32 %v260
      %v265 = vcvt.s32.f32 %v261
      %v266 = vld [vmem:[#allocation2] sm:$0xff]
      %v267 = vld [vmem:[#allocation2 + $0x8] sm:$0xff]
      %v268 = vld [vmem:[#allocation2 + $0x10] sm:$0xff]
      %v269 = vld [vmem:[#allocation2 + $0x18] sm:$0xff]
      %v270 = vmul.f32 %v250, %v262
      %v271 = vmul.f32 %v251, %v263
      %v272 = vmul.f32 %v252, %v264
      %v273 = vmul.f32 %v253, %v265
      %v274 = vadd.f32 %v270, 0.0
      %v275 = vadd.f32 %v271, 0.0
      %v276 = vadd.f32 %v272, 0.0
      %v277 = vadd.f32 %v273, 0.0
      %v278 = vadd.f32 %v266, %v274
      %v279 = vadd.f32 %v267, %v275
      %v280 = vadd.f32 %v268, %v276
      %v281 = vadd.f32 %v269, %v277
      %282 = vst [vmem:[#allocation2] sm:$0xff] %v278
      %283 = vst [vmem:[#allocation2 + $0x8] sm:$0xff] %v279
      %284 = vst [vmem:[#allocation2 + $0x10] sm:$0xff] %v280
      %285 = vst [vmem:[#allocation2 + $0x18] sm:$0xff] %v281
      %v286 = vld [vmem:[#allocation3] sm:$0xff]
      %v287 = vld [vmem:[#allocation3 + $0x8] sm:$0xff]
      %v288 = vld [vmem:[#allocation3 + $0x10] sm:$0xff]
      %v289 = vld [vmem:[#allocation3 + $0x18] sm:$0xff]
      %v290 = vmul.f32 %v250, %v250
      %v291 = vmul.f32 %v251, %v251
      %v292 = vmul.f32 %v252, %v252
      %v293 = vmul.f32 %v253, %v253
      %v294 = vadd.f32 %v290, 0.0
      %v295 = vadd.f32 %v291, 0.0
      %v296 = vadd.f32 %v292, 0.0
      %v297 = vadd.f32 %v293, 0.0
      %v298 = vadd.f32 %v286, %v294
      %v299 = vadd.f32 %v287, %v295
      %v300 = vadd.f32 %v288, %v296
      %v301 = vadd.f32 %v289, %v297
      %302 = vst [vmem:[#allocation3] sm:$0xff] %v298
      %303 = vst [vmem:[#allocation3 + $0x8] sm:$0xff] %v299
      %304 = vst [vmem:[#allocation3 + $0x10] sm:$0xff] %v300
      %305 = vst [vmem:[#allocation3 + $0x18] sm:$0xff] %v301
      %v306 = vld [vmem:[#allocation4] sm:$0xff]
      %v307 = vld [vmem:[#allocation4 + $0x8] sm:$0xff]
      %v308 = vld [vmem:[#allocation4 + $0x10] sm:$0xff]
      %v309 = vld [vmem:[#allocation4 + $0x18] sm:$0xff]
      %v310 = vadd.f32 %v262, 0.0
      %v311 = vadd.f32 %v263, 0.0
      %v312 = vadd.f32 %v264, 0.0
      %v313 = vadd.f32 %v265, 0.0
      %v314 = vadd.f32 %v306, %v310
      %v315 = vadd.f32 %v307, %v311
      %v316 = vadd.f32 %v308, %v312
      %v317 = vadd.f32 %v309, %v313
      %318 = vst [vmem:[#allocation4] sm:$0xff] %v314
      %319 = vst [vmem:[#allocation4 + $0x8] sm:$0xff] %v315
      %320 = vst [vmem:[#allocation4 + $0x10] sm:$0xff] %v316
      %321 = vst [vmem:[#allocation4 + $0x18] sm:$0xff] %v317
      // Predicated region
      $region33: #{dice_loss.1} parent=27 // pred_check
        %p322 = pneg %p193
      $region34: #{dice_loss.1} parent=27 // pred_check_branch
        %324 = sbr.rel (%p322) target = $region36
      $region35: #{dice_loss.1} parent=27 // pred_region
        %v325 = vld [vmem:[#allocation2] sm:$0xff]
        %v326 = vld [vmem:[#allocation2 + $0x8] sm:$0xff]
        %v327 = vld [vmem:[#allocation2 + $0x10] sm:$0xff]
        %v328 = vld [vmem:[#allocation2 + $0x18] sm:$0xff]
        %329 = vadd.xlane.f32.xlu0 %v325
        %v330 = vpop.xlane.xlu0 %329
        %331 = vadd.xlane.f32.xlu0 %v326
        %v332 = vpop.xlane.xlu0 %331
        %333 = vadd.xlane.f32.xlu0 %v327
        %v334 = vpop.xlane.xlu0 %333
        %335 = vadd.xlane.f32.xlu0 %v328
        %v336 = vpop.xlane.xlu0 %335
        %v341 = vperm.slane %v330, %v240
        %v342 = vperm.slane %v332, %v240
        %v343 = vperm.slane %v334, %v240
        %v344 = vperm.slane %v336, %v240
        %vm345 = vcmask 1041409
        %v346 = vsel %vm345, %v342, %v341
        %vm347 = vcmask 1042434
        %v348 = vsel %vm347, %v343, %v346
        %vm349 = vcmask 1043459
        %v350 = vsel %vm349, %v344, %v348
        %vm352 = vcmask 60416
        %v353 = vsel %vm352, %v350, 0.0
        %354 = vadd.xlane.f32.xlu0 %v353
        %v355 = vpop.xlane.xlu0 %354
        %v356 = vld [vmem:[#allocation3] sm:$0xff]
        %v357 = vld [vmem:[#allocation3 + $0x8] sm:$0xff]
        %v358 = vld [vmem:[#allocation3 + $0x10] sm:$0xff]
        %v359 = vld [vmem:[#allocation3 + $0x18] sm:$0xff]
        %360 = vadd.xlane.f32.xlu0 %v356
        %v361 = vpop.xlane.xlu0 %360
        %362 = vadd.xlane.f32.xlu0 %v357
        %v363 = vpop.xlane.xlu0 %362
        %364 = vadd.xlane.f32.xlu0 %v358
        %v365 = vpop.xlane.xlu0 %364
        %366 = vadd.xlane.f32.xlu0 %v359
        %v367 = vpop.xlane.xlu0 %366
        %v372 = vperm.slane %v361, %v240
        %v373 = vperm.slane %v363, %v240
        %v374 = vperm.slane %v365, %v240
        %v375 = vperm.slane %v367, %v240
        %v376 = vsel %vm345, %v373, %v372
        %v377 = vsel %vm347, %v374, %v376
        %v378 = vsel %vm349, %v375, %v377
        %v380 = vsel %vm352, %v378, 0.0
        %381 = vadd.xlane.f32.xlu0 %v380
        %v382 = vpop.xlane.xlu0 %381
        %v383 = vld [vmem:[#allocation4] sm:$0xff]
        %v384 = vld [vmem:[#allocation4 + $0x8] sm:$0xff]
        %v385 = vld [vmem:[#allocation4 + $0x10] sm:$0xff]
        %v386 = vld [vmem:[#allocation4 + $0x18] sm:$0xff]
        %387 = vadd.xlane.f32.xlu0 %v383
        %v388 = vpop.xlane.xlu0 %387
        %389 = vadd.xlane.f32.xlu0 %v384
        %v390 = vpop.xlane.xlu0 %389
        %391 = vadd.xlane.f32.xlu0 %v385
        %v392 = vpop.xlane.xlu0 %391
        %393 = vadd.xlane.f32.xlu0 %v386
        %v394 = vpop.xlane.xlu0 %393
        %v399 = vperm.slane %v388, %v240
        %v400 = vperm.slane %v390, %v240
        %v401 = vperm.slane %v392, %v240
        %v402 = vperm.slane %v394, %v240
        %v403 = vsel %vm345, %v400, %v399
        %v404 = vsel %vm347, %v401, %v403
        %v405 = vsel %vm349, %v402, %v404
        %v407 = vsel %vm352, %v405, 0.0
        %408 = vadd.xlane.f32.xlu0 %v407
        %v409 = vpop.xlane.xlu0 %408
        %vm410 = vcmask 7168
        %v411 = vsel %vm410, %v355, %v382
        %vm412 = vcmask 15360
        %v413 = vsel %vm412, %v411, %v409
        %vm414 = vcmask 19456
        %415 = vst.msk [vmem:[%s192] sm:$0xf] %vm414, %v413
      $region36: #{dice_loss.1} parent=27 // pred_fallthru
        _
      %p416 = scmp.lt.s32.totalorder %s17, 1
      %s417 = scalar_select %p416, %s17, 1
      %s418 = smul.addr %s417, 4
      %s419 = scalar_lea.vmem %s2, %s418
      // Predicated region
      $region37: #{dice_loss.1} parent=27 // pred_check
        %p420 = pneg %p99
      $region38: #{dice_loss.1} parent=27 // pred_check_branch
        %422 = sbr.rel (%p420) target = $region40
      $region39: #{dice_loss.1} parent=27 // pred_region
        _
      $region40: #{dice_loss.1} parent=27 // pred_fallthru
        _
    $region28: #{dice_loss.1} parent=5 // pred_fallthru
      _
    %p423 = scmp.le.s32.totalorder 2, %s8
    // Predicated region
    $region41: #{dice_loss.1} parent=5 // pred_check
      %p424 = pneg %p423
    $region42: #{dice_loss.1} parent=5 // pred_check_branch
      %426 = sbr.rel (%p424) target = $region44
    $region43: #{dice_loss.1} parent=5 // pred_region
      %s427 = ssub.s32 %s8, 2
      // Predicated region
      $region45: #{dice_loss.1} parent=43 // pred_check
        %p428 = pneg %p105
      $region46: #{dice_loss.1} parent=43 // pred_check_branch
        %430 = sbr.rel (%p428) target = $region48
      $region47: #{dice_loss.1} parent=43 // pred_region
        %p431 = scmp.lt.s32.totalorder %s19, 1
        %s432 = scalar_select %p431, %s19, 1
        %s433 = smul.addr %s432, 4
        %s434 = scalar_lea.vmem %s2, %s433
      $region48: #{dice_loss.1} parent=43 // pred_fallthru
        _
    $region44: #{dice_loss.1} parent=5 // pred_fallthru
      _
  $region6: #{dice_loss.1} parent=0 // loop_footer
    %s12 = sadd.s32 1, %s8
  $region7: #{dice_loss.1} parent=0 // loop_footer_branch
    %7 = sbr.rel target = $region3
  $region8: #{dice_loss.1} parent=0 // loop_exit
    _

</llo_original>
